<compile_context>
chip_gen: v5e
topology: v5e:2x2
jax: 0.10.0
libtpu: 0.0.40
codegen_flags: <defaults>
</compile_context>

<pallas_src>
import functools
import math

import jax
import jax.numpy as jnp
from jax import lax
from jax.experimental import pallas as pl
from jax.experimental.pallas import tpu as pltpu


def _cdiv(a, b):
    return -(-a // b)


def _round_up(a, m):
    return _cdiv(a, m) * m


@functools.lru_cache(maxsize=1)
def _vmem_limits():
    """Chip-aware (scoped VMEM limit, per-kernel tile byte budget)."""
    cap = 64 * 1024 * 1024  # conservative fallback = v7x per-TensorCore VMEM
    try:
        cap = int(getattr(pltpu.get_tpu_info(), "vmem_capacity_bytes", cap))
    except Exception:
        pass
    limit = int(cap * 0.7)
    budget = cap // 6
    return limit, budget


# ----------------------------------------------------------------------------
# Part 1: Encoder (spec module) — final LayerNorm as a Pallas kernel
# ----------------------------------------------------------------------------
def _layer_norm_kernel(x_ref, a_ref, b_ref, o_ref, *, eps, n_features):
    x = x_ref[...].astype(jnp.float32)                       # (TR, D) row tile
    mean = jnp.mean(x, axis=-1, keepdims=True)
    centered = x - mean
    # torch.Tensor.std is unbiased (divides by D - 1)
    var = jnp.sum(centered * centered, axis=-1, keepdims=True) * (
        1.0 / (n_features - 1))
    std = jnp.sqrt(var)
    # Per-row reciprocal (EUP) on the (TR, 1) column instead of a broadcast
    # divide over the full (TR, D) tile; one Newton step keeps it f32-exact.
    denom = std + eps
    inv = pl.reciprocal(denom, approx=True)
    inv = inv * (2.0 - denom * inv)
    a = a_ref[...].astype(jnp.float32)                       # (1, D)
    b = b_ref[...].astype(jnp.float32)                       # (1, D)
    o_ref[...] = (centered * inv * a + b).astype(o_ref.dtype)


def layer_norm(x2d, a2, b2, *, eps=1e-6, row_tile=None, vmem_budget_bytes=None):
    """x2d: [R, D]; a2, b2: [D]. Row-tiled, lane-dense (feature dim on lanes)."""
    r, d = x2d.shape
    vmem_limit, budget = _vmem_limits()
    if vmem_budget_bytes is not None:
        budget = vmem_budget_bytes

    itemsize = jnp.dtype(x2d.dtype).itemsize
    if row_tile is None:
        # Double-buffered in/out blocks + ~3 f32 intermediates per row
        # (x upcast, centered, scaled result).
        per_row_bytes = 2 * (2 * d * itemsize) + 3 * d * 4
        rt = budget // max(1, per_row_bytes)
        rt = min(rt, 2048)                                    # bandwidth sweet spot
        rt = min(rt, (4 << 20) // max(1, d * itemsize))       # ~<=4 MiB per x block
        rt = max(8, (rt // 8) * 8)
        # Keep >= 2 row tiles so the megacore-"parallel" axis feeds both v7x TCs.
        half = max(8, _round_up(_cdiv(r, 2), 8))
        rt = min(rt, half)
        row_tile = int(rt)
    row_tile = min(_round_up(int(row_tile), 8), _round_up(r, 8))

    kernel = functools.partial(_layer_norm_kernel, eps=float(eps), n_features=int(d))
    out = pl.pallas_call(
        kernel,
        out_shape=jax.ShapeDtypeStruct((r, d), x2d.dtype),
        grid_spec=pltpu.PrefetchScalarGridSpec(
            num_scalar_prefetch=0,
            grid=(_cdiv(r, row_tile),),
            in_specs=[
                pl.BlockSpec((row_tile, d), lambda i: (i, 0)),   # x row tile
                pl.BlockSpec((1, d), lambda i: (0, 0)),          # a_2 (resident)
                pl.BlockSpec((1, d), lambda i: (0, 0)),          # b_2 (resident)
            ],
            out_specs=pl.BlockSpec((row_tile, d), lambda i: (i, 0)),
        ),
        compiler_params=pltpu.CompilerParams(
            dimension_semantics=("parallel",),                   # rows independent
            vmem_limit_bytes=vmem_limit,
        ),
    )(x2d, a2.reshape(1, d), b2.reshape(1, d))
    return out


def encoder_forward(x, mask, a2, b2, layers=(), eps=1e-6):
    """Encoder.forward: for layer in layers: x = layer(x, mask); return norm(x)."""
    # TODO(synk): EncoderLayer (`layer` passed to Encoder.__init__) is not defined in
    # the provided spec; externally supplied layer callables are applied here as-is.
    # When the layer stack becomes Pallas kernels, fuse this final LayerNorm into the
    # last layer's residual-add kernel to save one full HBM round trip.
    for layer in layers:
        x = layer(x, mask)
    b, s, d = x.shape
    y = layer_norm(x.reshape(b * s, d), a2, b2, eps=eps)
    return y.reshape(b, s, d)


def _layer_norm_reference(x2d, a2, b2, *, eps=1e-6):
    mean = jnp.mean(x2d, axis=-1, keepdims=True)
    var = jnp.sum((x2d - mean) ** 2, axis=-1, keepdims=True) / (x2d.shape[-1] - 1)
    std = jnp.sqrt(var)
    return a2 * (x2d - mean) / (std + eps) + b2


# ----------------------------------------------------------------------------
# Part 2: LabelSmoothing loss kernel (previously reviewed), feedback applied
# ----------------------------------------------------------------------------
def _label_smoothing_kernel(x_ref, t_ref, o_ref, *, confidence, base, ent,
                            padding_idx, n_rows, row_tile):
    ti = pl.program_id(0)

    x = x_ref[...]                                # (TN, V), native dtype (no upcast)
    tgt = t_ref[...]                              # (TN, 1) int32 targets
    tn, v = x.shape
    col = lax.broadcasted_iota(jnp.int32, (tn, v), 1)

    # sum_j(true_dist * x) decomposed so the wide tile sees only one compare +
    # one select; reductions accumulate in f32 (XLU lane reduces).
    #   row_dot = base*sum(x) + (conf-base)*x[tgt] - base*x[pad]
    s_all = jnp.sum(x, axis=-1, keepdims=True, dtype=jnp.float32)
    s_tgt = jnp.sum(jnp.where(col == tgt, x, jnp.zeros_like(x)),
                    axis=-1, keepdims=True, dtype=jnp.float32)
    s_pad = x[:, padding_idx:padding_idx + 1].astype(jnp.float32)  # static column slice
    row_dot = (jnp.float32(base) * s_all
               + jnp.float32(confidence - base) * s_tgt
               - jnp.float32(base) * s_pad)                        # (TN, 1)

    # Row validity: real row (remainder masking) and target != padding_idx.
    row_ids = ti * row_tile + lax.broadcasted_iota(jnp.int32, (tn, 1), 0)
    valid = jnp.logical_and(tgt != padding_idx, row_ids < n_rows)

    # KL(sum) row loss = sum(td*log td) - sum(td*x); the first term is the
    # trace-time constant `ent` for every non-padded row.
    row_loss = jnp.where(valid, jnp.float32(ent) - row_dot, jnp.float32(0.0))
    partial = jnp.sum(row_loss)                                    # scalar per tile

    # Lane-dense writeback: one full (8,128) store per tile; wrapper reads [:,0,0].
    o_ref[...] = jnp.broadcast_to(partial, o_ref.shape).astype(jnp.float32)


def label_smoothing_loss(x, target, *, padding_idx, smoothing,
                         row_tile=None, vmem_budget_bytes=None):
    """x: [N, V] log-probs (f32 or bf16), target: [N] int. Returns scalar f32 loss."""
    n, v = x.shape
    assert v > 2, "label smoothing requires vocab size > 2 (smoothing / (V - 2))"
    confidence = 1.0 - smoothing
    base = smoothing / (v - 2)

    # Trace-time constant: sum(td * log(td)) for a non-padded row (xlogy, 0*log0 = 0).
    ent = 0.0
    if confidence > 0.0:
        ent += confidence * math.log(confidence)
    if base > 0.0:
        ent += (v - 2) * base * math.log(base)

    vmem_limit, budget = _vmem_limits()
    if vmem_budget_bytes is not None:
        budget = vmem_budget_bytes

    itemsize = jnp.dtype(x.dtype).itemsize
    n_pad = _round_up(n, 8)
    if row_tile is None:
        # Double-buffered x block + one native-dtype select temp + small columns.
        per_row_bytes = 2 * v * itemsize + v * itemsize + 64
        rt = budget // max(1, per_row_bytes)
        rt = min(rt, 2048)                                    # bandwidth sweet spot
        rt = min(rt, (4 << 20) // max(1, v * itemsize))       # ~<=4 MiB per x block
        rt = max(8, (rt // 8) * 8)
        # Keep >= 2 tiles so the "parallel" axis feeds both v7x TensorCores.
        half = max(8, _round_up(_cdiv(n, 2), 8))
        rt = min(rt, half)
        row_tile = int(rt)
    row_tile = min(_round_up(int(row_tile), 8), n_pad)
    num_tiles = _cdiv(n, row_tile)

    tgt2d = target.astype(jnp.int32).reshape(n, 1)

    kernel = functools.partial(
        _label_smoothing_kernel,
        confidence=float(confidence),
        base=float(base),
        ent=float(ent),
        padding_idx=int(padding_idx),
        n_rows=int(n),
        row_tile=int(row_tile),
    )

    partials = pl.pallas_call(
        kernel,
        out_shape=jax.ShapeDtypeStruct((num_tiles, 8, 128), jnp.float32),
        grid_spec=pltpu.PrefetchScalarGridSpec(
            num_scalar_prefetch=0,
            grid=(num_tiles,),
            in_specs=[
                pl.BlockSpec((row_tile, v), lambda t: (t, 0)),   # x row tile
                pl.BlockSpec((row_tile, 1), lambda t: (t, 0)),   # targets
            ],
            # Each tile owns one lane-dense output block, written exactly once.
            out_specs=pl.BlockSpec((1, 8, 128), lambda t: (t, 0, 0)),
        ),
        compiler_params=pltpu.CompilerParams(
            dimension_semantics=("parallel",),
            vmem_limit_bytes=vmem_limit,
        ),
    )(x, tgt2d)

    return jnp.sum(partials[:, 0, 0])   # tiny final reduction in the wrapper


def _label_smoothing_reference(x, target, *, padding_idx, smoothing):
    n, v = x.shape
    confidence = 1.0 - smoothing
    col = jnp.arange(v)[None, :]
    tgt = target[:, None]
    td = jnp.full((n, v), smoothing / (v - 2), dtype=jnp.float32)
    td = jnp.where(col == tgt, confidence, td)
    td = jnp.where(col == padding_idx, 0.0, td)
    td = jnp.where(tgt == padding_idx, 0.0, td)
    xlogy = jnp.where(td > 0, td * jnp.log(jnp.where(td > 0, td, 1.0)), 0.0)
    return jnp.sum(xlogy - td * x.astype(jnp.float32))


# ----------------------------------------------------------------------------
if __name__ == "__main__":
    key = jax.random.PRNGKey(0)
    k1, k2, k3, k4, k5 = jax.random.split(key, 5)

    # ---- Encoder (pasted spec): final LayerNorm over the (undefined) layer stack ----
    B, S, D = 2, 8, 32
    x_enc = jax.random.normal(k1, (B, S, D), dtype=jnp.float32)
    mask = jnp.ones((B, 1, S), dtype=jnp.float32)             # consumed only by layers
    a2 = 1.0 + 0.1 * jax.random.normal(k2, (D,), dtype=jnp.float32)   # LayerNorm.a_2
    b2 = 0.1 * jax.random.normal(k3, (D,), dtype=jnp.float32)         # LayerNorm.b_2

    y = encoder_forward(x_enc, mask, a2, b2, layers=())
    y = jax.block_until_ready(y)
    y_ref = _layer_norm_reference(x_enc.reshape(B * S, D), a2, b2, eps=1e-6)
    y_ref = y_ref.reshape(B, S, D)
    assert jnp.allclose(y, y_ref, rtol=1e-4, atol=1e-4), "Encoder LayerNorm mismatch"

    # ---- LabelSmoothing loss kernel (previously reviewed), improved version ----
    SIZE = 32          # vocab
    PADDING_IDX = 0
    SMOOTHING = 0.1
    N = 16             # tokens (batch * seq flattened)

    logits = jax.random.normal(k4, (N, SIZE), dtype=jnp.float32)
    x_ls = jax.nn.log_softmax(logits, axis=-1)
    target = jax.random.randint(k5, (N,), 0, SIZE, dtype=jnp.int32)
    target = target.at[0].set(PADDING_IDX).at[5].set(PADDING_IDX)

    loss = label_smoothing_loss(x_ls, target, padding_idx=PADDING_IDX,
                                smoothing=SMOOTHING)
    loss = jax.block_until_ready(loss)
    loss_ref = _label_smoothing_reference(x_ls, target, padding_idx=PADDING_IDX,
                                          smoothing=SMOOTHING)
    assert jnp.allclose(loss, loss_ref, rtol=1e-4, atol=1e-3), (loss, loss_ref)

    print("KERNEL_OK")
</pallas_src>

<mosaic_0001>
module attributes {stable_mosaic.version = 11 : i64} {
  func.func @_layer_norm_kernel(%arg0: i32, %arg1: memref<8x32xf32, #tpu.memory_space<vmem>>, %arg2: memref<1x32xf32, #tpu.memory_space<vmem>>, %arg3: memref<1x32xf32, #tpu.memory_space<vmem>>, %arg4: memref<8x32xf32, #tpu.memory_space<vmem>>) attributes {dimension_semantics = [#tpu.dimension_semantics<parallel>], iteration_bounds = array<i64: 2>, scalar_prefetch = 0 : i64, scratch_operands = 0 : i64, tpu.core_type = #tpu.core_type<tc>, window_params = [{transform_indices = @transform_0, window_bounds = array<i64: 8, 32>}, {pipeline_mode = #tpu.pipeline_mode<synchronous>, transform_indices = @transform_1, window_bounds = array<i64: 1, 32>}, {pipeline_mode = #tpu.pipeline_mode<synchronous>, transform_indices = @transform_2, window_bounds = array<i64: 1, 32>}, {transform_indices = @transform_3, window_bounds = array<i64: 8, 32>}]} {
    %c0 = arith.constant 0 : index
    %c0_0 = arith.constant 0 : index
    %0 = vector.load %arg1[%c0, %c0_0] : memref<8x32xf32, #tpu.memory_space<vmem>>, vector<8x32xf32>
    %cst = arith.constant dense<0.000000e+00> : vector<8xf32>
    %1 = vector.multi_reduction <add>, %0, %cst [1] : vector<8x32xf32> to vector<8xf32>
    %2 = vector.shape_cast %1 : vector<8xf32> to vector<8x1xf32>
    %cst_1 = arith.constant 3.200000e+01 : f32
    %3 = vector.broadcast %cst_1 : f32 to vector<8x1xf32>
    %4 = arith.divf %2, %3 : vector<8x1xf32>
    %5 = vector.broadcast %4 : vector<8x1xf32> to vector<8x32xf32>
    %6 = arith.subf %0, %5 : vector<8x32xf32>
    %7 = arith.mulf %6, %6 : vector<8x32xf32>
    %cst_2 = arith.constant dense<0.000000e+00> : vector<8xf32>
    %8 = vector.multi_reduction <add>, %7, %cst_2 [1] : vector<8x32xf32> to vector<8xf32>
    %9 = vector.shape_cast %8 : vector<8xf32> to vector<8x1xf32>
    %cst_3 = arith.constant 0.0322580636 : f32
    %10 = vector.broadcast %cst_3 : f32 to vector<8x1xf32>
    %11 = arith.mulf %9, %10 : vector<8x1xf32>
    %12 = math.sqrt %11 : vector<8x1xf32>
    %cst_4 = arith.constant 9.99999997E-7 : f32
    %13 = vector.broadcast %cst_4 : f32 to vector<8x1xf32>
    %14 = arith.addf %12, %13 : vector<8x1xf32>
    %15 = tpu.reciprocal %14 {approx = true} : vector<8x1xf32> -> vector<8x1xf32>
    %16 = arith.mulf %14, %15 : vector<8x1xf32>
    %cst_5 = arith.constant 2.000000e+00 : f32
    %17 = vector.broadcast %cst_5 : f32 to vector<8x1xf32>
    %18 = arith.subf %17, %16 : vector<8x1xf32>
    %19 = arith.mulf %15, %18 : vector<8x1xf32>
    %c0_6 = arith.constant 0 : index
    %c0_7 = arith.constant 0 : index
    %20 = vector.load %arg2[%c0_6, %c0_7] : memref<1x32xf32, #tpu.memory_space<vmem>>, vector<1x32xf32>
    %c0_8 = arith.constant 0 : index
    %c0_9 = arith.constant 0 : index
    %21 = vector.load %arg3[%c0_8, %c0_9] : memref<1x32xf32, #tpu.memory_space<vmem>>, vector<1x32xf32>
    %22 = vector.broadcast %19 : vector<8x1xf32> to vector<8x32xf32>
    %23 = arith.mulf %6, %22 : vector<8x32xf32>
    %24 = vector.broadcast %20 : vector<1x32xf32> to vector<8x32xf32>
    %25 = arith.mulf %23, %24 : vector<8x32xf32>
    %26 = vector.broadcast %21 : vector<1x32xf32> to vector<8x32xf32>
    %27 = arith.addf %25, %26 : vector<8x32xf32>
    %c0_10 = arith.constant 0 : index
    %c0_11 = arith.constant 0 : index
    %28 = vector.load %arg4[%c0_10, %c0_11] : memref<8x32xf32, #tpu.memory_space<vmem>>, vector<8x32xf32>
    tpu.vector_store %arg4[%c0_10, %c0_11], %27 {strides = array<i32>} : memref<8x32xf32, #tpu.memory_space<vmem>>, vector<8x32xf32>,
    return
  }
  func.func @transform_0(%arg0: i32) -> (i32, i32) {
    %c0_i32 = arith.constant 0 : i32
    %c0_i32_0 = arith.constant 0 : i32
    return %arg0, %c0_i32 : i32, i32
  }
  func.func @transform_1(%arg0: i32) -> (i32, i32) {
    %c0_i32 = arith.constant 0 : i32
    %c0_i32_0 = arith.constant 0 : i32
    %c0_i32_1 = arith.constant 0 : i32
    return %c0_i32, %c0_i32_0 : i32, i32
  }
  func.func @transform_2(%arg0: i32) -> (i32, i32) {
    %c0_i32 = arith.constant 0 : i32
    %c0_i32_0 = arith.constant 0 : i32
    %c0_i32_1 = arith.constant 0 : i32
    return %c0_i32, %c0_i32_0 : i32, i32
  }
  func.func @transform_3(%arg0: i32) -> (i32, i32) {
    %c0_i32 = arith.constant 0 : i32
    %c0_i32_0 = arith.constant 0 : i32
    return %arg0, %c0_i32 : i32, i32
  }
}

</mosaic_0001>

<llo_original>
// kernel: tpu_custom_call.1
$region0: #{tpu_custom_call.1}
  #allocation0 [shape = 'u32[]', space=smem, size = 0x4, offset = 0x4, fixed_abs, tag = 'smem constant byte address 0x4 - core index']
  #allocation1 [shape = 'u32[72,128]{1,0:T(1,128)}', space=vmem, size = 0x9000, scoped, tag = 'internal scratch']
  %s0 = inlined_call_operand.hbm [shape: f32[16,32], index: 0, kind: input, shape index: {}]
  %s1 = inlined_call_operand.hbm [shape: f32[1,32], index: 1, kind: input, shape index: {}]
  %s2 = inlined_call_operand.vmem [shape: f32[1,32], index: 2, kind: input, shape index: {}]
  %s3 = inlined_call_operand.hbm [shape: f32[16,32], index: 3, kind: output, shape index: {}]
  %s4 = sld [smem:[#allocation0]]
  $region53: #{tpu_custom_call.1} parent=0
    _
  %s6 = ssub.s32 1, %s4
  %s7 = scalar_select 0, %s6, %s4
  $region1: #{tpu_custom_call.1} parent=0
    #allocation2 [shape = 'u8[8192]{0}', space=vmem, size = 0x2000, scoped, tag = 'input window, operand 0']
    #allocation3 [shape = 's32[2]{0}', space=sflag, size = 0x8, scoped, tag = 'scoped memory for tpu_custom_call.1']
    #allocation4 [shape = 's32[2]{0}', space=sflag, size = 0x8, scoped, tag = 'scoped memory for tpu_custom_call.1']
    #allocation5 [shape = 'u8[512]{0}', space=vmem, size = 0x400, scoped, tag = 'input window, operand 1, single buffered']
    #allocation6 [shape = 's32[1]{0}', space=sflag, size = 0x4, scoped, tag = 'scoped memory for tpu_custom_call.1']
    #allocation7 [shape = 'u8[8192]{0}', space=vmem, size = 0x2000, scoped, tag = 'output window, operand 0']
    %8 = vsyncpa [#allocation3], 0
    %s9 = scalar_lea.sflag [#allocation3], 1
    %10 = vsyncpa %s9, 0
    %11 = vsyncpa [#allocation6], 0
    %12 = vsyncpa [#allocation4], 0
    %s13 = scalar_lea.sflag [#allocation4], 1
    %14 = vsyncpa %s13, 0
    loop: start=0, step=1, limit=4
    $region2: #{tpu_custom_call.1} parent=1 // loop_pre_header
      _
    $region3: #{tpu_custom_call.1} parent=1 // loop_header
      %s16 = sphi 0, %s20
      %p17 = scmp.ge.s32.totalorder %s16, 4
      %s26 = sphi 0, %s28
      %s29 = sphi 0, %s26
      %s30 = sphi 0, %s29
      %s46 = sphi 0, %s30
      %s50 = sphi 0, %s50
      %s52 = sphi 0, %s50
      %s53 = sphi 0, %s52
      %s67 = sphi 0, %s53
      %s71 = sphi 0, %s71
      %s73 = sphi 0, %s71
      %s74 = sphi 0, %s73
      %s88 = sphi 0, %s74
      %s94 = sphi 0, %s96
      %s97 = sphi 0, %s94
      %s98 = sphi 0, %s97
      %s114 = sphi 0, %s98
    $region4: #{tpu_custom_call.1} parent=1 // loop_header_branch
      %19 = sbr.rel (%p17) target = $region8
    $region5: #{tpu_custom_call.1} parent=1 // loop_body
      %s21 = ssub.s32 %s16, 1
      %s22 = ssub.s32 %s16, 2
      %s23 = sadd.s32 %s16, 1
      %s24 = ssub.s32 %s16, %s23
      %p25 = scmp.eq.s32.totalorder %s24, 0
      %s27 = sadd.s32 %s26, 1
      %s28 = scalar_select %p25, %s26, %s27
      %p31 = pneg %p25
      %p32 = scmp.eq.s32.totalorder %s16, 1
      %p33 = por %p31, %p32
      %p34 = scmp.ne.s32.totalorder %s26, %s29
      %p35 = scmp.eq.s32.totalorder %s16, 0
      %p36 = por %p34, %p35
      %p37 = scmp.ne.s32.totalorder %s26, %s29
      %p38 = scmp.eq.s32.totalorder %s21, 1
      %p39 = por %p37, %p38
      %p40 = scmp.ne.s32.totalorder %s29, %s30
      %p41 = scmp.eq.s32.totalorder %s21, 0
      %p42 = por %p40, %p41
      %p43 = scmp.ne.s32.totalorder %s29, %s30
      %p44 = scmp.eq.s32.totalorder %s22, 1
      %p45 = por %p43, %p44
      %p47 = scmp.ne.s32.totalorder %s30, %s46
      %p48 = scmp.eq.s32.totalorder %s22, 0
      %p49 = por %p47, %p48
      %s51 = sadd.s32 %s50, 1
      %p54 = scmp.eq.s32.totalorder %s16, 1
      %p55 = scmp.ne.s32.totalorder %s50, %s52
      %p56 = scmp.eq.s32.totalorder %s16, 0
      %p57 = por %p55, %p56
      %p58 = scmp.ne.s32.totalorder %s50, %s52
      %p59 = scmp.eq.s32.totalorder %s21, 1
      %p60 = por %p58, %p59
      %p61 = scmp.ne.s32.totalorder %s52, %s53
      %p62 = scmp.eq.s32.totalorder %s21, 0
      %p63 = por %p61, %p62
      %p64 = scmp.ne.s32.totalorder %s52, %s53
      %p65 = scmp.eq.s32.totalorder %s22, 1
      %p66 = por %p64, %p65
      %p68 = scmp.ne.s32.totalorder %s53, %s67
      %p69 = scmp.eq.s32.totalorder %s22, 0
      %p70 = por %p68, %p69
      %s72 = sadd.s32 %s71, 1
      %p75 = scmp.eq.s32.totalorder %s16, 1
      %p76 = scmp.ne.s32.totalorder %s71, %s73
      %p77 = scmp.eq.s32.totalorder %s16, 0
      %p78 = por %p76, %p77
      %p79 = scmp.ne.s32.totalorder %s71, %s73
      %p80 = scmp.eq.s32.totalorder %s21, 1
      %p81 = por %p79, %p80
      %p82 = scmp.ne.s32.totalorder %s73, %s74
      %p83 = scmp.eq.s32.totalorder %s21, 0
      %p84 = por %p82, %p83
      %p85 = scmp.ne.s32.totalorder %s73, %s74
      %p86 = scmp.eq.s32.totalorder %s22, 1
      %p87 = por %p85, %p86
      %p89 = scmp.ne.s32.totalorder %s74, %s88
      %p90 = scmp.eq.s32.totalorder %s22, 0
      %p91 = por %p89, %p90
      %s92 = ssub.s32 %s16, %s23
      %p93 = scmp.eq.s32.totalorder %s92, 0
      %s95 = sadd.s32 %s94, 1
      %s96 = scalar_select %p93, %s94, %s95
      %p99 = pneg %p93
      %p100 = scmp.eq.s32.totalorder %s16, 1
      %p101 = por %p99, %p100
      %p102 = scmp.ne.s32.totalorder %s94, %s97
      %p103 = scmp.eq.s32.totalorder %s16, 0
      %p104 = por %p102, %p103
      %p105 = scmp.ne.s32.totalorder %s94, %s97
      %p106 = scmp.eq.s32.totalorder %s21, 1
      %p107 = por %p105, %p106
      %p108 = scmp.ne.s32.totalorder %s97, %s98
      %p109 = scmp.eq.s32.totalorder %s21, 0
      %p110 = por %p108, %p109
      %p111 = scmp.ne.s32.totalorder %s97, %s98
      %p112 = scmp.eq.s32.totalorder %s22, 1
      %p113 = por %p111, %p112
      %p115 = scmp.ne.s32.totalorder %s98, %s114
      %p116 = scmp.eq.s32.totalorder %s22, 0
      %p117 = por %p115, %p116
      %p118 = scmp.le.s32.totalorder 1, %s16
      %p119 = scmp.lt.s32.totalorder %s16, 3
      %p120 = pnand %p118, %p119
      %p121 = pneg %p120
      // Predicated region
      $region9: #{tpu_custom_call.1} parent=5 // pred_check
        _
      $region10: #{tpu_custom_call.1} parent=5 // pred_check_branch
        %123 = sbr.rel (%p120) target = $region12
      $region11: #{tpu_custom_call.1} parent=5 // pred_region
        %s124 = ssub.s32 %s16, 1
        // Predicated region
        $region13: #{tpu_custom_call.1} parent=11 // pred_check
          %p125 = pneg %p63
        $region14: #{tpu_custom_call.1} parent=11 // pred_check_branch
          %127 = sbr.rel (%p125) target = $region16
        $region15: #{tpu_custom_call.1} parent=11 // pred_region
          %129 = vsyncadd [#allocation6], 0
          %s131 = sshll.u32 %s1, 4
          %s132 = int_to_ptr.hbm [resolvable:$true] %s131
          %s133 = sshll.u32 [#allocation5], 4
          %s134 = int_to_ptr.vmem [resolvable:$true] %s133
          %136 = dma.hbm_to_vmem [thread:$0]  %s132, 16, %s134, [#allocation6]
        $region16: #{tpu_custom_call.1} parent=11 // pred_fallthru
          _
        // Predicated region
        $region17: #{tpu_custom_call.1} parent=11 // pred_check
          %p137 = pneg %p84
        $region18: #{tpu_custom_call.1} parent=11 // pred_check_branch
          %139 = sbr.rel (%p137) target = $region20
        $region19: #{tpu_custom_call.1} parent=11 // pred_region
          _
        $region20: #{tpu_custom_call.1} parent=11 // pred_fallthru
          _
      $region12: #{tpu_custom_call.1} parent=5 // pred_fallthru
        _
      %p140 = scmp.lt.s32.totalorder %s16, 2
      // Predicated region
      $region21: #{tpu_custom_call.1} parent=5 // pred_check
        %p141 = pneg %p140
      $region22: #{tpu_custom_call.1} parent=5 // pred_check_branch
        %143 = sbr.rel (%p141) target = $region24
      $region23: #{tpu_custom_call.1} parent=5 // pred_region
        // Predicated region
        $region25: #{tpu_custom_call.1} parent=23 // pred_check
          %p144 = pneg %p36
        $region26: #{tpu_custom_call.1} parent=23 // pred_check_branch
          %146 = sbr.rel (%p144) target = $region28
        $region27: #{tpu_custom_call.1} parent=23 // pred_region
          %s147 = sand.u32 %s26, 1
          %s148 = scalar_lea.sflag [#allocation3], %s147
          %s149 = sand.u32 %s26, 1
          %s150 = smul.addr %s149, 8
          %s151 = scalar_lea.vmem [#allocation2], %s150
          %153 = vsyncadd %s148, 0
          %s154 = smul.addr %s16, 8
          %s155 = scalar_lea.hbm %s0, %s154
          %s157 = sshll.u32 %s155, 4
          %s158 = int_to_ptr.hbm [resolvable:$true] %s157
          %s159 = sshll.u32 %s151, 4
          %s160 = int_to_ptr.vmem [resolvable:$true] %s159
          %162 = dma.hbm_to_vmem [thread:$0]  %s158, 128, %s160, %s148
        $region28: #{tpu_custom_call.1} parent=23 // pred_fallthru
          _
      $region24: #{tpu_custom_call.1} parent=5 // pred_fallthru
        _
      %p163 = scmp.le.s32.totalorder 1, %s16
      %p164 = scmp.lt.s32.totalorder %s16, 3
      %p165 = pnand %p163, %p164
      %p166 = pneg %p165
      // Predicated region
      $region29: #{tpu_custom_call.1} parent=5 // pred_check
        _
      $region30: #{tpu_custom_call.1} parent=5 // pred_check_branch
        %168 = sbr.rel (%p165) target = $region32
      $region31: #{tpu_custom_call.1} parent=5 // pred_region
        %s169 = ssub.s32 %s16, 1
        %s170 = sand.u32 %s29, 1
        %s171 = scalar_lea.sflag [#allocation3], %s170
        %s172 = sand.u32 %s29, 1
        %s173 = smul.addr %s172, 8
        %s174 = scalar_lea.vmem [#allocation2], %s173
        // Predicated region
        $region33: #{tpu_custom_call.1} parent=31 // pred_check
          %p175 = pneg %p42
        $region34: #{tpu_custom_call.1} parent=31 // pred_check_branch
          %177 = sbr.rel (%p175) target = $region36
        $region35: #{tpu_custom_call.1} parent=31 // pred_region
          %179 = dma.done %s171, 128
        $region36: #{tpu_custom_call.1} parent=31 // pred_fallthru
          _
        // Predicated region
        $region37: #{tpu_custom_call.1} parent=31 // pred_check
          %p180 = pneg %p63
        $region38: #{tpu_custom_call.1} parent=31 // pred_check_branch
          %182 = sbr.rel (%p180) target = $region40
        $region39: #{tpu_custom_call.1} parent=31 // pred_region
          %184 = dma.done [#allocation6], 16
        $region40: #{tpu_custom_call.1} parent=31 // pred_fallthru
          _
        %s185 = sand.u32 %s29, 1
        %s186 = scalar_lea.sflag [#allocation3], %s185
        %s187 = sand.u32 %s29, 1
        %s188 = smul.addr %s187, 8
        %s189 = scalar_lea.vmem [#allocation2], %s188
        %p190 = pneg %p42
        %p191 = pneg %p39
        %p192 = pneg %p63
        %p193 = pneg %p60
        %p194 = pneg %p84
        %p195 = pneg %p81
        %p196 = pneg %p110
        %p197 = pneg %p107
        %s198 = sand.u32 %s97, 1
        %s199 = scalar_lea.sflag [#allocation4], %s198
        %s200 = sand.u32 %s97, 1
        %s201 = smul.addr %s200, 8
        %s202 = scalar_lea.vmem [#allocation7], %s201
        %v203 = vld [vmem:[%s174] sm:$0xff]
        %vm204 = vcmask 261120
        %v205 = vsel %vm204, %v203, 0.0
        %206 = vadd.xlane.f32.xlu0 %v205
        %v207 = vpop.xlane.xlu0 %206
        %v208 = vrcp.pop 32.0
        %v209 = vmul.f32 32.0, %v208
        %v210 = vsub.f32 1.0, %v209
        %v211 = vmul.f32 %v208, %v210
        %v212 = vadd.f32 %v208, %v211
        %vm213 = vweird.f32 %v208
        %v214 = vsel %vm213, %v208, %v212
        %v215 = vmul.f32 %v207, %v214
        %v216 = vsub.f32 %v203, %v215
        %v217 = vmul.f32 %v216, %v216
        %v218 = vsel %vm204, %v217, 0.0
        %219 = vadd.xlane.f32.xlu0 %v218
        %v220 = vpop.xlane.xlu0 %219
        %v221 = vmul.f32 %v220, 0.032258064
        %v222 = vrsqrt.pop %v221
        %v223 = vmul.f32 %v222, %v221
        %v224 = vmul.f32 %v223, %v222
        %v225 = vmul.f32 0.5, %v224
        %v226 = vsub.f32 1.5, %v225
        %v227 = vmul.f32 %v222, %v226
        %v228 = vmul.f32 %v221, %v227
        %vm229 = vcmp.eq.f32.partialorder %v221, inf
        %v230 = vsel %vm229, %v221, %v228
        %vm231 = vcmp.eq.f32.partialorder %v221, 0.0
        %v232 = vand.u32 %v221, 2147483648
        %v233 = vsel %vm231, %v232, %v230
        %v234 = vadd.f32 %v233, 1e-06
        %v235 = vrcp.pop %v234
        %v236 = vmul.f32 %v234, %v235
        %v237 = vsub.f32 2.0, %v236
        %v238 = vmul.f32 %v235, %v237
        %v239 = vld [vmem:[#allocation5] sm:$0x1]
        %v240 = vld [vmem:[%s2] sm:$0x1]
        %v241 = vmul.f32 %v216, %v238
        %v243 = vperm.slane %v239, 0
        %v245 = vmul.f32 %v241, %v243
        %v247 = vperm.slane %v240, 0
        %v249 = vadd.f32 %v245, %v247
        %250 = vst.msk [vmem:[%s202] sm:$0xff] %vm204, %v249
        %s251 = sand.u32 %s97, 1
        %s252 = scalar_lea.sflag [#allocation4], %s251
        %s253 = sand.u32 %s97, 1
        %s254 = smul.addr %s253, 8
        %s255 = scalar_lea.vmem [#allocation7], %s254
        // Predicated region
        $region41: #{tpu_custom_call.1} parent=31 // pred_check
          %p256 = pneg %p107
        $region42: #{tpu_custom_call.1} parent=31 // pred_check_branch
          %258 = sbr.rel (%p256) target = $region44
        $region43: #{tpu_custom_call.1} parent=31 // pred_region
          %260 = vsyncadd %s252, 0
          %s261 = smul.addr %s21, 8
          %s262 = scalar_lea.hbm %s3, %s261
          %s264 = sshll.u32 %s255, 4
          %s265 = int_to_ptr.vmem [resolvable:$true] %s264
          %s266 = sshll.u32 %s262, 4
          %s267 = int_to_ptr.hbm [resolvable:$true] %s266
          %269 = dma.vmem_to_hbm [thread:$0]  %s265, 128, %s267, %s252
        $region44: #{tpu_custom_call.1} parent=31 // pred_fallthru
          _
      $region32: #{tpu_custom_call.1} parent=5 // pred_fallthru
        _
      %p270 = scmp.le.s32.totalorder 2, %s16
      // Predicated region
      $region45: #{tpu_custom_call.1} parent=5 // pred_check
        %p271 = pneg %p270
      $region46: #{tpu_custom_call.1} parent=5 // pred_check_branch
        %273 = sbr.rel (%p271) target = $region48
      $region47: #{tpu_custom_call.1} parent=5 // pred_region
        %s274 = ssub.s32 %s16, 2
        // Predicated region
        $region49: #{tpu_custom_call.1} parent=47 // pred_check
          %p275 = pneg %p113
        $region50: #{tpu_custom_call.1} parent=47 // pred_check_branch
          %277 = sbr.rel (%p275) target = $region52
        $region51: #{tpu_custom_call.1} parent=47 // pred_region
          %s278 = sand.u32 %s98, 1
          %s279 = scalar_lea.sflag [#allocation4], %s278
          %s280 = sand.u32 %s98, 1
          %s281 = smul.addr %s280, 8
          %s282 = scalar_lea.vmem [#allocation7], %s281
          %284 = dma.done %s279, 128
        $region52: #{tpu_custom_call.1} parent=47 // pred_fallthru
          _
      $region48: #{tpu_custom_call.1} parent=5 // pred_fallthru
        _
    $region6: #{tpu_custom_call.1} parent=1 // loop_footer
      %s20 = sadd.s32 1, %s16
    $region7: #{tpu_custom_call.1} parent=1 // loop_footer_branch
      %15 = sbr.rel target = $region3
    $region8: #{tpu_custom_call.1} parent=1 // loop_exit
      _
    %285 = vsyncpa [#allocation3], 1
    %s286 = scalar_lea.sflag [#allocation3], 1
    %287 = vsyncpa %s286, 1
    %288 = vsyncpa [#allocation6], 1
    %289 = vsyncpa [#allocation4], 1
    %s290 = scalar_lea.sflag [#allocation4], 1
    %291 = vsyncpa %s290, 1

</llo_original>
